<compile_context>
chip_gen: v7x
topology: tpu7x:2x2x1
jax: 0.10.0
libtpu: 0.0.40
codegen_flags: <defaults>
</compile_context>

<pallas_src>
import functools

import jax
import jax.numpy as jnp
from jax import lax
from jax.experimental import pallas as pl
from jax.experimental.pallas import tpu as pltpu


def _bce_loss_kernel(x_ref, targ_ref, out_ref, acc_ref, *,
                     cm1, tile_c, tile_n, n_valid, need_tail_mask, need_cls_mask):
    """One (batch-tile i, class-tile j) grid step.

    x_ref:    (tile_c, tile_s, 128)  logits of classes [1 + j*tile_c, ...)
    targ_ref: (tile_s, 128)          int32 labels
    out_ref:  (1, 8, 128)            per-batch-block partial sums (written on last class step)
    acc_ref:  (tile_s, 128) f32      per-column accumulator, resident across class steps
    """
    i = pl.program_id(0)          # batch-tile index  ("parallel")
    j = pl.program_id(1)          # class-tile index  ("arbitrary", reduction)

    @pl.when(j == 0)
    def _():
        acc_ref[...] = jnp.zeros_like(acc_ref)

    targ = targ_ref[...]          # int32 (tile_s, 128), loaded once per step
    tile_s, lanes = targ.shape
    cls_base = j * tile_c         # 0-based offset into classes 1..C-1

    def body(k, per_col):
        x = x_ref[k].astype(jnp.float32)            # (tile_s, 128), lane-dense
        # BCE-with-logits against a one-hot target, softplus form:
        #   t = 1 -> softplus(-x), t = 0 -> softplus(x);  note |z| == |x|
        hit = targ == (cls_base + k + 1)
        z = jnp.where(hit, -x, x)
        contrib = jnp.maximum(z, 0.0) + jnp.log1p(jnp.exp(-jnp.abs(x)))
        if need_cls_mask:         # static: only when the class grid is ragged
            contrib = jnp.where(cls_base + k < cm1, contrib, 0.0)
        return per_col + contrib

    unroll = True if tile_c <= 16 else 8
    per_col = lax.fori_loop(0, tile_c, body,
                            jnp.zeros((tile_s, lanes), jnp.float32),
                            unroll=unroll)
    acc_ref[...] += per_col

    @pl.when(j == pl.num_programs(1) - 1)
    def _():
        total = acc_ref[...]
        if need_tail_mask:        # static: skipped when batch divides the tile exactly
            sub = lax.broadcasted_iota(jnp.int32, (tile_s, lanes), 0)
            lane = lax.broadcasted_iota(jnp.int32, (tile_s, lanes), 1)
            gidx = i * tile_n + sub * 128 + lane
            total = jnp.where(gidx < n_valid, total, 0.0)
        # fold sublane groups into one (8, 128) partial (pure VPU adds); the single
        # cross-lane reduce + divide happens once, in the wrapper epilogue.
        out_ref[...] = jnp.sum(total.reshape(tile_s // 8, 8, lanes), axis=0)[None]


def bce_loss(pred, targ, num_classes):
    """Pallas implementation of BCE_Loss.forward.

    pred: [N, num_classes] float logits (f32 or bf16)
    targ: [N] integer labels in [0, num_classes)
    returns: scalar float32
    """
    n, c = pred.shape
    assert c == num_classes, "pred must be [N, num_classes]"
    assert num_classes > 1, "num_classes must be > 1 (reference divides by C-1)"
    cm1 = c - 1
    itemsize = jnp.dtype(pred.dtype).itemsize

    # ---- tiling -------------------------------------------------------------
    s_total = -(-n // 128)                    # sublane rows of the batch axis
    s_pad = -(-s_total // 8) * 8              # pad batch only to a multiple of 1024
    n_slab = s_pad * 128

    target_block_bytes = 6 * 1024 * 1024      # ~6 MiB pred block; 2x-buffered ~12 MiB
    row_bytes = 128 * itemsize
    if cm1 * 8 * row_bytes <= target_block_bytes:
        tile_c = cm1                          # all classes in one block (common case)
        tile_s = target_block_bytes // (cm1 * row_bytes)
        tile_s = min(tile_s, 2048, s_pad)
        tile_s = (tile_s // 16) * 16 if tile_s >= 16 else 8   # bf16-friendly
    else:
        tile_s = 8                            # huge num_classes: split the class axis
        tile_c = max(1, min(cm1, target_block_bytes // (tile_s * row_bytes)))
    tile_n = tile_s * 128

    grid_s = -(-s_pad // tile_s)
    grid_c = -(-cm1 // tile_c)
    need_tail_mask = (grid_s * tile_n != n)
    need_cls_mask = (grid_c * tile_c != cm1)

    # ---- slab construction: ONE fused relayout copy -------------------------
    # Class-major, class 0 sliced away at the source, minimal batch pad (<1024 rows)
    # fused into the same copy.  Layout plumbing only; no compute hoisted.
    pred_cm = jnp.swapaxes(pred[:, 1:], 0, 1)               # [cm1, N]
    targ_i32 = targ.astype(jnp.int32)
    if n_slab != n:
        pred_cm = jnp.pad(pred_cm, ((0, 0), (0, n_slab - n)))
        targ_i32 = jnp.pad(targ_i32, (0, n_slab - n))
    pred_slab = pred_cm.reshape(cm1, s_pad, 128)            # lane-dense batch
    targ_slab = targ_i32.reshape(s_pad, 128)

    kernel = functools.partial(
        _bce_loss_kernel, cm1=cm1, tile_c=tile_c, tile_n=tile_n, n_valid=n,
        need_tail_mask=need_tail_mask, need_cls_mask=need_cls_mask)

    partials = pl.pallas_call(
        kernel,
        out_shape=jax.ShapeDtypeStruct((grid_s, 8, 128), jnp.float32),
        grid=(grid_s, grid_c),
        in_specs=[
            pl.BlockSpec((tile_c, tile_s, 128), lambda i, j: (j, i, 0)),
            pl.BlockSpec((tile_s, 128), lambda i, j: (i, 0)),
        ],
        out_specs=pl.BlockSpec((1, 8, 128), lambda i, j: (i, 0, 0)),
        scratch_shapes=[pltpu.VMEM((tile_s, 128), jnp.float32)],
        compiler_params=pltpu.CompilerParams(
            dimension_semantics=("parallel", "arbitrary"),
            vmem_limit_bytes=32 * 1024 * 1024,   # ~16-18 MiB actually used; v7x-safe
        ),
    )(pred_slab, targ_slab)

    # single cross-lane reduce + divide by (num_classes - 1), once
    return jnp.sum(partials) / jnp.float32(num_classes - 1)


def _reference(pred, targ, num_classes):
    # pure-JAX reference (mirrors the PyTorch module)
    t = jax.nn.one_hot(targ, num_classes, dtype=jnp.float32)[:, 1:]
    x = pred[:, 1:].astype(jnp.float32)
    l = jnp.maximum(x, 0.0) - x * t + jnp.log1p(jnp.exp(-jnp.abs(x)))
    return jnp.sum(l) / (num_classes - 1)


if __name__ == "__main__":
    key = jax.random.PRNGKey(0)

    # case 1: small shapes consistent with the module (pred [N, C], targ [N])
    num_classes, batch = 8, 16
    k1, k2, key = jax.random.split(key, 3)
    pred = jax.random.normal(k1, (batch, num_classes), dtype=jnp.float32)
    targ = jax.random.randint(k2, (batch,), 0, num_classes, dtype=jnp.int32)
    loss = jax.jit(bce_loss, static_argnums=2)(pred, targ, num_classes)
    jax.block_until_ready(loss)
    ref = _reference(pred, targ, num_classes)
    assert jnp.allclose(loss, ref, rtol=1e-5, atol=1e-4), (loss, ref)

    # case 2: ragged batch (not a multiple of 128) exercises pad + tail mask
    num_classes2, batch2 = 5, 200
    k1, k2, key = jax.random.split(key, 3)
    pred2 = jax.random.normal(k1, (batch2, num_classes2), dtype=jnp.float32)
    targ2 = jax.random.randint(k2, (batch2,), 0, num_classes2, dtype=jnp.int32)
    loss2 = jax.jit(bce_loss, static_argnums=2)(pred2, targ2, num_classes2)
    jax.block_until_ready(loss2)
    ref2 = _reference(pred2, targ2, num_classes2)
    assert jnp.allclose(loss2, ref2, rtol=1e-5, atol=1e-4), (loss2, ref2)

    # case 3: bf16 logits pass straight through (f32 math inside the kernel)
    pred3 = pred.astype(jnp.bfloat16)
    loss3 = jax.jit(bce_loss, static_argnums=2)(pred3, targ, num_classes)
    jax.block_until_ready(loss3)
    ref3 = _reference(pred3.astype(jnp.float32), targ, num_classes)
    assert jnp.allclose(loss3, ref3, rtol=1e-5, atol=1e-3), (loss3, ref3)

    print("KERNEL_OK")
</pallas_src>

<mosaic_0001>
module attributes {stable_mosaic.version = 11 : i64} {
  func.func @_bce_loss_kernel(%arg0: i32, %arg1: i32, %arg2: memref<7x8x128xf32, #tpu.memory_space<vmem>>, %arg3: memref<8x128xi32, #tpu.memory_space<vmem>>, %arg4: memref<1x8x128xf32, #tpu.memory_space<vmem>>, %arg5: memref<8x128xf32, #tpu.memory_space<vmem>>) attributes {dimension_semantics = [#tpu.dimension_semantics<parallel>, #tpu.dimension_semantics<arbitrary>], iteration_bounds = array<i64: 1, 1>, scalar_prefetch = 0 : i64, scratch_operands = 1 : i64, tpu.core_type = #tpu.core_type<tc>, window_params = [{transform_indices = @transform_0, window_bounds = array<i64: 7, 8, 128>}, {transform_indices = @transform_1, window_bounds = array<i64: 8, 128>}, {transform_indices = @transform_2, window_bounds = array<i64: 1, 8, 128>}]} {
    %c0_i32 = arith.constant 0 : i32
    %0 = arith.cmpi eq, %arg1, %c0_i32 : i32
    %1 = arith.extui %0 : i1 to i32
    %c0_i32_0 = arith.constant 0 : i32
    %2 = arith.cmpi ne, %1, %c0_i32_0 : i32
    scf.if %2 {
      %cst_52 = arith.constant 0.000000e+00 : f32
      %145 = vector.broadcast %cst_52 : f32 to vector<8x128xf32>
      %c0_53 = arith.constant 0 : index
      %c0_54 = arith.constant 0 : index
      %146 = vector.load %arg5[%c0_53, %c0_54] : memref<8x128xf32, #tpu.memory_space<vmem>>, vector<8x128xf32>
      tpu.vector_store %arg5[%c0_53, %c0_54], %145 {strides = array<i32>} : memref<8x128xf32, #tpu.memory_space<vmem>>, vector<8x128xf32>,
    } else {
    }
    %c0 = arith.constant 0 : index
    %c0_1 = arith.constant 0 : index
    %3 = vector.load %arg3[%c0, %c0_1] : memref<8x128xi32, #tpu.memory_space<vmem>>, vector<8x128xi32>
    %c7_i32 = arith.constant 7 : i32
    %4 = arith.muli %arg1, %c7_i32 : i32
    %cst = arith.constant 0.000000e+00 : f32
    %5 = vector.broadcast %cst : f32 to vector<8x128xf32>
    %c0_i32_2 = arith.constant 0 : i32
    %6 = arith.index_cast %c0_i32_2 : i32 to index
    %c0_3 = arith.constant 0 : index
    %c0_4 = arith.constant 0 : index
    %7 = vector.load %arg2[%6, %c0_3, %c0_4] : memref<7x8x128xf32, #tpu.memory_space<vmem>>, vector<1x8x128xf32>
    %8 = vector.shape_cast %7 : vector<1x8x128xf32> to vector<8x128xf32>
    %9 = arith.addi %4, %c0_i32_2 : i32
    %c1_i32 = arith.constant 1 : i32
    %10 = arith.addi %9, %c1_i32 : i32
    %11 = vector.broadcast %10 : i32 to vector<8x128xi32>
    %12 = arith.cmpi eq, %3, %11 : vector<8x128xi32>
    %cst_5 = arith.constant 0.000000e+00 : f32
    %13 = vector.broadcast %cst_5 : f32 to vector<8x128xf32>
    %14 = arith.subf %13, %8 : vector<8x128xf32>
    %15 = arith.select %12, %14, %8 : vector<8x128xi1>, vector<8x128xf32>
    %cst_6 = arith.constant 0.000000e+00 : f32
    %16 = vector.broadcast %cst_6 : f32 to vector<8x128xf32>
    %17 = arith.maximumf %15, %16 : vector<8x128xf32>
    %18 = math.absf %8 : vector<8x128xf32>
    %cst_7 = arith.constant 0.000000e+00 : f32
    %19 = vector.broadcast %cst_7 : f32 to vector<8x128xf32>
    %20 = arith.subf %19, %18 : vector<8x128xf32>
    %21 = math.exp %20 : vector<8x128xf32>
    %22 = math.log1p %21 : vector<8x128xf32>
    %23 = arith.addf %17, %22 : vector<8x128xf32>
    %24 = arith.addf %5, %23 : vector<8x128xf32>
    %c1_i32_8 = arith.constant 1 : i32
    %25 = arith.index_cast %c1_i32_8 : i32 to index
    %c0_9 = arith.constant 0 : index
    %c0_10 = arith.constant 0 : index
    %26 = vector.load %arg2[%25, %c0_9, %c0_10] : memref<7x8x128xf32, #tpu.memory_space<vmem>>, vector<1x8x128xf32>
    %27 = vector.shape_cast %26 : vector<1x8x128xf32> to vector<8x128xf32>
    %28 = arith.addi %4, %c1_i32_8 : i32
    %c1_i32_11 = arith.constant 1 : i32
    %29 = arith.addi %28, %c1_i32_11 : i32
    %30 = vector.broadcast %29 : i32 to vector<8x128xi32>
    %31 = arith.cmpi eq, %3, %30 : vector<8x128xi32>
    %cst_12 = arith.constant 0.000000e+00 : f32
    %32 = vector.broadcast %cst_12 : f32 to vector<8x128xf32>
    %33 = arith.subf %32, %27 : vector<8x128xf32>
    %34 = arith.select %31, %33, %27 : vector<8x128xi1>, vector<8x128xf32>
    %cst_13 = arith.constant 0.000000e+00 : f32
    %35 = vector.broadcast %cst_13 : f32 to vector<8x128xf32>
    %36 = arith.maximumf %34, %35 : vector<8x128xf32>
    %37 = math.absf %27 : vector<8x128xf32>
    %cst_14 = arith.constant 0.000000e+00 : f32
    %38 = vector.broadcast %cst_14 : f32 to vector<8x128xf32>
    %39 = arith.subf %38, %37 : vector<8x128xf32>
    %40 = math.exp %39 : vector<8x128xf32>
    %41 = math.log1p %40 : vector<8x128xf32>
    %42 = arith.addf %36, %41 : vector<8x128xf32>
    %43 = arith.addf %24, %42 : vector<8x128xf32>
    %c2_i32 = arith.constant 2 : i32
    %44 = arith.index_cast %c2_i32 : i32 to index
    %c0_15 = arith.constant 0 : index
    %c0_16 = arith.constant 0 : index
    %45 = vector.load %arg2[%44, %c0_15, %c0_16] : memref<7x8x128xf32, #tpu.memory_space<vmem>>, vector<1x8x128xf32>
    %46 = vector.shape_cast %45 : vector<1x8x128xf32> to vector<8x128xf32>
    %47 = arith.addi %4, %c2_i32 : i32
    %c1_i32_17 = arith.constant 1 : i32
    %48 = arith.addi %47, %c1_i32_17 : i32
    %49 = vector.broadcast %48 : i32 to vector<8x128xi32>
    %50 = arith.cmpi eq, %3, %49 : vector<8x128xi32>
    %cst_18 = arith.constant 0.000000e+00 : f32
    %51 = vector.broadcast %cst_18 : f32 to vector<8x128xf32>
    %52 = arith.subf %51, %46 : vector<8x128xf32>
    %53 = arith.select %50, %52, %46 : vector<8x128xi1>, vector<8x128xf32>
    %cst_19 = arith.constant 0.000000e+00 : f32
    %54 = vector.broadcast %cst_19 : f32 to vector<8x128xf32>
    %55 = arith.maximumf %53, %54 : vector<8x128xf32>
    %56 = math.absf %46 : vector<8x128xf32>
    %cst_20 = arith.constant 0.000000e+00 : f32
    %57 = vector.broadcast %cst_20 : f32 to vector<8x128xf32>
    %58 = arith.subf %57, %56 : vector<8x128xf32>
    %59 = math.exp %58 : vector<8x128xf32>
    %60 = math.log1p %59 : vector<8x128xf32>
    %61 = arith.addf %55, %60 : vector<8x128xf32>
    %62 = arith.addf %43, %61 : vector<8x128xf32>
    %c3_i32 = arith.constant 3 : i32
    %63 = arith.index_cast %c3_i32 : i32 to index
    %c0_21 = arith.constant 0 : index
    %c0_22 = arith.constant 0 : index
    %64 = vector.load %arg2[%63, %c0_21, %c0_22] : memref<7x8x128xf32, #tpu.memory_space<vmem>>, vector<1x8x128xf32>
    %65 = vector.shape_cast %64 : vector<1x8x128xf32> to vector<8x128xf32>
    %66 = arith.addi %4, %c3_i32 : i32
    %c1_i32_23 = arith.constant 1 : i32
    %67 = arith.addi %66, %c1_i32_23 : i32
    %68 = vector.broadcast %67 : i32 to vector<8x128xi32>
    %69 = arith.cmpi eq, %3, %68 : vector<8x128xi32>
    %cst_24 = arith.constant 0.000000e+00 : f32
    %70 = vector.broadcast %cst_24 : f32 to vector<8x128xf32>
    %71 = arith.subf %70, %65 : vector<8x128xf32>
    %72 = arith.select %69, %71, %65 : vector<8x128xi1>, vector<8x128xf32>
    %cst_25 = arith.constant 0.000000e+00 : f32
    %73 = vector.broadcast %cst_25 : f32 to vector<8x128xf32>
    %74 = arith.maximumf %72, %73 : vector<8x128xf32>
    %75 = math.absf %65 : vector<8x128xf32>
    %cst_26 = arith.constant 0.000000e+00 : f32
    %76 = vector.broadcast %cst_26 : f32 to vector<8x128xf32>
    %77 = arith.subf %76, %75 : vector<8x128xf32>
    %78 = math.exp %77 : vector<8x128xf32>
    %79 = math.log1p %78 : vector<8x128xf32>
    %80 = arith.addf %74, %79 : vector<8x128xf32>
    %81 = arith.addf %62, %80 : vector<8x128xf32>
    %c4_i32 = arith.constant 4 : i32
    %82 = arith.index_cast %c4_i32 : i32 to index
    %c0_27 = arith.constant 0 : index
    %c0_28 = arith.constant 0 : index
    %83 = vector.load %arg2[%82, %c0_27, %c0_28] : memref<7x8x128xf32, #tpu.memory_space<vmem>>, vector<1x8x128xf32>
    %84 = vector.shape_cast %83 : vector<1x8x128xf32> to vector<8x128xf32>
    %85 = arith.addi %4, %c4_i32 : i32
    %c1_i32_29 = arith.constant 1 : i32
    %86 = arith.addi %85, %c1_i32_29 : i32
    %87 = vector.broadcast %86 : i32 to vector<8x128xi32>
    %88 = arith.cmpi eq, %3, %87 : vector<8x128xi32>
    %cst_30 = arith.constant 0.000000e+00 : f32
    %89 = vector.broadcast %cst_30 : f32 to vector<8x128xf32>
    %90 = arith.subf %89, %84 : vector<8x128xf32>
    %91 = arith.select %88, %90, %84 : vector<8x128xi1>, vector<8x128xf32>
    %cst_31 = arith.constant 0.000000e+00 : f32
    %92 = vector.broadcast %cst_31 : f32 to vector<8x128xf32>
    %93 = arith.maximumf %91, %92 : vector<8x128xf32>
    %94 = math.absf %84 : vector<8x128xf32>
    %cst_32 = arith.constant 0.000000e+00 : f32
    %95 = vector.broadcast %cst_32 : f32 to vector<8x128xf32>
    %96 = arith.subf %95, %94 : vector<8x128xf32>
    %97 = math.exp %96 : vector<8x128xf32>
    %98 = math.log1p %97 : vector<8x128xf32>
    %99 = arith.addf %93, %98 : vector<8x128xf32>
    %100 = arith.addf %81, %99 : vector<8x128xf32>
    %c5_i32 = arith.constant 5 : i32
    %101 = arith.index_cast %c5_i32 : i32 to index
    %c0_33 = arith.constant 0 : index
    %c0_34 = arith.constant 0 : index
    %102 = vector.load %arg2[%101, %c0_33, %c0_34] : memref<7x8x128xf32, #tpu.memory_space<vmem>>, vector<1x8x128xf32>
    %103 = vector.shape_cast %102 : vector<1x8x128xf32> to vector<8x128xf32>
    %104 = arith.addi %4, %c5_i32 : i32
    %c1_i32_35 = arith.constant 1 : i32
    %105 = arith.addi %104, %c1_i32_35 : i32
    %106 = vector.broadcast %105 : i32 to vector<8x128xi32>
    %107 = arith.cmpi eq, %3, %106 : vector<8x128xi32>
    %cst_36 = arith.constant 0.000000e+00 : f32
    %108 = vector.broadcast %cst_36 : f32 to vector<8x128xf32>
    %109 = arith.subf %108, %103 : vector<8x128xf32>
    %110 = arith.select %107, %109, %103 : vector<8x128xi1>, vector<8x128xf32>
    %cst_37 = arith.constant 0.000000e+00 : f32
    %111 = vector.broadcast %cst_37 : f32 to vector<8x128xf32>
    %112 = arith.maximumf %110, %111 : vector<8x128xf32>
    %113 = math.absf %103 : vector<8x128xf32>
    %cst_38 = arith.constant 0.000000e+00 : f32
    %114 = vector.broadcast %cst_38 : f32 to vector<8x128xf32>
    %115 = arith.subf %114, %113 : vector<8x128xf32>
    %116 = math.exp %115 : vector<8x128xf32>
    %117 = math.log1p %116 : vector<8x128xf32>
    %118 = arith.addf %112, %117 : vector<8x128xf32>
    %119 = arith.addf %100, %118 : vector<8x128xf32>
    %c6_i32 = arith.constant 6 : i32
    %120 = arith.index_cast %c6_i32 : i32 to index
    %c0_39 = arith.constant 0 : index
    %c0_40 = arith.constant 0 : index
    %121 = vector.load %arg2[%120, %c0_39, %c0_40] : memref<7x8x128xf32, #tpu.memory_space<vmem>>, vector<1x8x128xf32>
    %122 = vector.shape_cast %121 : vector<1x8x128xf32> to vector<8x128xf32>
    %123 = arith.addi %4, %c6_i32 : i32
    %c1_i32_41 = arith.constant 1 : i32
    %124 = arith.addi %123, %c1_i32_41 : i32
    %125 = vector.broadcast %124 : i32 to vector<8x128xi32>
    %126 = arith.cmpi eq, %3, %125 : vector<8x128xi32>
    %cst_42 = arith.constant 0.000000e+00 : f32
    %127 = vector.broadcast %cst_42 : f32 to vector<8x128xf32>
    %128 = arith.subf %127, %122 : vector<8x128xf32>
    %129 = arith.select %126, %128, %122 : vector<8x128xi1>, vector<8x128xf32>
    %cst_43 = arith.constant 0.000000e+00 : f32
    %130 = vector.broadcast %cst_43 : f32 to vector<8x128xf32>
    %131 = arith.maximumf %129, %130 : vector<8x128xf32>
    %132 = math.absf %122 : vector<8x128xf32>
    %cst_44 = arith.constant 0.000000e+00 : f32
    %133 = vector.broadcast %cst_44 : f32 to vector<8x128xf32>
    %134 = arith.subf %133, %132 : vector<8x128xf32>
    %135 = math.exp %134 : vector<8x128xf32>
    %136 = math.log1p %135 : vector<8x128xf32>
    %137 = arith.addf %131, %136 : vector<8x128xf32>
    %138 = arith.addf %119, %137 : vector<8x128xf32>
    %c7_i32_45 = arith.constant 7 : i32
    %c0_46 = arith.constant 0 : index
    %c0_47 = arith.constant 0 : index
    %139 = vector.load %arg5[%c0_46, %c0_47] : memref<8x128xf32, #tpu.memory_space<vmem>>, vector<8x128xf32>
    %140 = arith.addf %139, %138 : vector<8x128xf32>
    %c0_48 = arith.constant 0 : index
    %c0_49 = arith.constant 0 : index
    %141 = vector.load %arg5[%c0_48, %c0_49] : memref<8x128xf32, #tpu.memory_space<vmem>>, vector<8x128xf32>
    tpu.vector_store %arg5[%c0_48, %c0_49], %140 {strides = array<i32>} : memref<8x128xf32, #tpu.memory_space<vmem>>, vector<8x128xf32>,
    %c0_i32_50 = arith.constant 0 : i32
    %142 = arith.cmpi eq, %arg1, %c0_i32_50 : i32
    %143 = arith.extui %142 : i1 to i32
    %c0_i32_51 = arith.constant 0 : i32
    %144 = arith.cmpi ne, %143, %c0_i32_51 : i32
    scf.if %144 {
      %c0_52 = arith.constant 0 : index
      %c0_53 = arith.constant 0 : index
      %145 = vector.load %arg5[%c0_52, %c0_53] : memref<8x128xf32, #tpu.memory_space<vmem>>, vector<8x128xf32>
      %146 = tpu.iota {dimensions = array<i32: 0>} : vector<8x128xi32>
      %147 = tpu.iota {dimensions = array<i32: 1>} : vector<8x128xi32>
      %c1024_i32 = arith.constant 1024 : i32
      %148 = arith.muli %arg0, %c1024_i32 : i32
      %c128_i32 = arith.constant 128 : i32
      %149 = vector.broadcast %c128_i32 : i32 to vector<8x128xi32>
      %150 = arith.muli %146, %149 : vector<8x128xi32>
      %151 = vector.broadcast %148 : i32 to vector<8x128xi32>
      %152 = arith.addi %151, %150 : vector<8x128xi32>
      %153 = arith.addi %152, %147 : vector<8x128xi32>
      %c16_i32 = arith.constant 16 : i32
      %154 = vector.broadcast %c16_i32 : i32 to vector<8x128xi32>
      %155 = arith.cmpi slt, %153, %154 : vector<8x128xi32>
      %cst_54 = arith.constant 0.000000e+00 : f32
      %156 = vector.broadcast %cst_54 : f32 to vector<8x128xf32>
      %157 = arith.select %155, %145, %156 : vector<8x128xi1>, vector<8x128xf32>
      %158 = vector.shape_cast %157 : vector<8x128xf32> to vector<1x8x128xf32>
      %cst_55 = arith.constant dense<0.000000e+00> : vector<8x128xf32>
      %159 = vector.multi_reduction <add>, %158, %cst_55 [0] : vector<1x8x128xf32> to vector<8x128xf32>
      %160 = vector.shape_cast %159 : vector<8x128xf32> to vector<1x8x128xf32>
      %c0_56 = arith.constant 0 : index
      %c0_57 = arith.constant 0 : index
      %c0_58 = arith.constant 0 : index
      %161 = vector.load %arg4[%c0_56, %c0_57, %c0_58] : memref<1x8x128xf32, #tpu.memory_space<vmem>>, vector<1x8x128xf32>
      tpu.vector_store %arg4[%c0_56, %c0_57, %c0_58], %160 {strides = array<i32>} : memref<1x8x128xf32, #tpu.memory_space<vmem>>, vector<1x8x128xf32>,
    } else {
    }
    return
  }
  func.func @transform_0(%arg0: i32, %arg1: i32) -> (i32, i32, i32) {
    %c0_i32 = arith.constant 0 : i32
    %c0_i32_0 = arith.constant 0 : i32
    return %arg1, %arg0, %c0_i32 : i32, i32, i32
  }
  func.func @transform_1(%arg0: i32, %arg1: i32) -> (i32, i32) {
    %c0_i32 = arith.constant 0 : i32
    %c0_i32_0 = arith.constant 0 : i32
    return %arg0, %c0_i32 : i32, i32
  }
  func.func @transform_2(%arg0: i32, %arg1: i32) -> (i32, i32, i32) {
    %c0_i32 = arith.constant 0 : i32
    %c0_i32_0 = arith.constant 0 : i32
    %c0_i32_1 = arith.constant 0 : i32
    return %arg0, %c0_i32, %c0_i32_0 : i32, i32, i32
  }
}

</mosaic_0001>

<llo_original>
// kernel: bce_loss.1
$region0: #{bce_loss.1}
  #allocation0 [shape = 'u32[]', space=smem, size = 0x4, offset = 0x4, fixed_abs, tag = 'smem constant byte address 0x4 - core index']
  #allocation1 [shape = 'u32[144,128]{1,0:T(1,128)}', space=vmem, size = 0x12000, scoped, tag = 'internal scratch']
  #allocation2 [shape = 'f32[8,128]{1,0:T(8,128)}', space=vmem, size = 0x1000, scoped, tag = 'scratch operand']
  %s0 = inlined_call_operand.vmem [shape: f32[7,8,128], index: 0, kind: input, shape index: {}]
  %s1 = inlined_call_operand.vmem [shape: s32[8,128], index: 1, kind: input, shape index: {}]
  %s2 = inlined_call_operand.vmem [shape: f32[1,8,128], index: 2, kind: output, shape index: {}]
  %s3 = sld [smem:[#allocation0]]
  $region26: #{bce_loss.1} parent=0
    _
  %s5 = ssub.s32 1, %s3
  %s6 = scalar_select 0, %s5, %s3
  // Predicated region
  $region2: #{bce_loss.1} parent=0 // pred_check
    _
  $region3: #{bce_loss.1} parent=0 // pred_check_branch
    %8 = sbr.rel (0) target = $region5
  $region4: #{bce_loss.1} parent=0 // pred_region
    _
  $region5: #{bce_loss.1} parent=0 // pred_fallthru
    _
  // Predicated region
  $region6: #{bce_loss.1} parent=0 // pred_check
    _
  $region7: #{bce_loss.1} parent=0 // pred_check_branch
    %10 = sbr.rel (0) target = $region9
  $region8: #{bce_loss.1} parent=0 // pred_region
    _
  $region9: #{bce_loss.1} parent=0 // pred_fallthru
    _
  %p11 = scmp.eq.s32.totalorder 0, 0
  // Predicated region
  $region10: #{bce_loss.1} parent=0 // pred_check
    %p12 = pneg %p11
  $region11: #{bce_loss.1} parent=0 // pred_check_branch
    %14 = sbr.rel (%p12) target = $region13
  $region12: #{bce_loss.1} parent=0 // pred_region
    %15 = vst [vmem:[#allocation2] sm:$0xff] 0.0
  $region13: #{bce_loss.1} parent=0 // pred_fallthru
    _
  %v16 = vld [vmem:[%s1] sm:$0xff]
  %s17 = smul.u32 0, 7
  %v18 = vld [vmem:[%s0] sm:$0xff]
  %s19 = sadd.s32 %s17, 1
  %v20 = vstv %s19
  %vm21 = vcmp.eq.s32.totalorder %v16, %v20
  %v22 = vsub.f32 0.0, %v18
  %v23 = vsel %vm21, %v22, %v18
  %v24 = vmax.f32 %v23, 0.0
  %v25 = vand.u32 2147483647, %v18
  %v26 = vsub.f32 0.0, %v25
  %v27 = vmul.f32 %v26, 1.442695
  %v28 = vpow.pop %v27
  %v29 = vadd.f32 %v28, 1.0
  %v30 = vlog2.pop %v29
  %v31 = vmul.f32 %v30, 0.6931472
  %v32 = vmul.f32 -0.5, %v28
  %v33 = vadd.f32 %v32, 1.0
  %v34 = vmul.f32 %v33, %v28
  %v35 = vand.u32 2147483647, %v28
  %vm36 = vcmp.lt.f32.partialorder %v35, 0.0004427343
  %v37 = vsel %vm36, %v34, %v31
  %v38 = vadd.f32 %v24, %v37
  %v39 = vadd.f32 %v38, 0.0
  %s40 = scalar_lea.vmem %s0, 8
  %v41 = vld [vmem:[%s40] sm:$0xff]
  %s42 = sadd.s32 %s17, 2
  %v43 = vstv %s42
  %vm44 = vcmp.eq.s32.totalorder %v16, %v43
  %v45 = vsub.f32 0.0, %v41
  %v46 = vsel %vm44, %v45, %v41
  %v47 = vmax.f32 %v46, 0.0
  %v48 = vand.u32 2147483647, %v41
  %v49 = vsub.f32 0.0, %v48
  %v50 = vmul.f32 %v49, 1.442695
  %v51 = vpow.pop %v50
  %v52 = vadd.f32 %v51, 1.0
  %v53 = vlog2.pop %v52
  %v54 = vmul.f32 %v53, 0.6931472
  %v55 = vmul.f32 -0.5, %v51
  %v56 = vadd.f32 %v55, 1.0
  %v57 = vmul.f32 %v56, %v51
  %v58 = vand.u32 2147483647, %v51
  %vm59 = vcmp.lt.f32.partialorder %v58, 0.0004427343
  %v60 = vsel %vm59, %v57, %v54
  %v61 = vadd.f32 %v47, %v60
  %v62 = vadd.f32 %v39, %v61
  %s63 = scalar_lea.vmem %s0, 16
  %v64 = vld [vmem:[%s63] sm:$0xff]
  %s65 = sadd.s32 %s17, 3
  %v66 = vstv %s65
  %vm67 = vcmp.eq.s32.totalorder %v16, %v66
  %v68 = vsub.f32 0.0, %v64
  %v69 = vsel %vm67, %v68, %v64
  %v70 = vmax.f32 %v69, 0.0
  %v71 = vand.u32 2147483647, %v64
  %v72 = vsub.f32 0.0, %v71
  %v73 = vmul.f32 %v72, 1.442695
  %v74 = vpow.pop %v73
  %v75 = vadd.f32 %v74, 1.0
  %v76 = vlog2.pop %v75
  %v77 = vmul.f32 %v76, 0.6931472
  %v78 = vmul.f32 -0.5, %v74
  %v79 = vadd.f32 %v78, 1.0
  %v80 = vmul.f32 %v79, %v74
  %v81 = vand.u32 2147483647, %v74
  %vm82 = vcmp.lt.f32.partialorder %v81, 0.0004427343
  %v83 = vsel %vm82, %v80, %v77
  %v84 = vadd.f32 %v70, %v83
  %v85 = vadd.f32 %v62, %v84
  %s86 = scalar_lea.vmem %s0, 24
  %v87 = vld [vmem:[%s86] sm:$0xff]
  %s88 = sadd.s32 %s17, 4
  %v89 = vstv %s88
  %vm90 = vcmp.eq.s32.totalorder %v16, %v89
  %v91 = vsub.f32 0.0, %v87
  %v92 = vsel %vm90, %v91, %v87
  %v93 = vmax.f32 %v92, 0.0
  %v94 = vand.u32 2147483647, %v87
  %v95 = vsub.f32 0.0, %v94
  %v96 = vmul.f32 %v95, 1.442695
  %v97 = vpow.pop %v96
  %v98 = vadd.f32 %v97, 1.0
  %v99 = vlog2.pop %v98
  %v100 = vmul.f32 %v99, 0.6931472
  %v101 = vmul.f32 -0.5, %v97
  %v102 = vadd.f32 %v101, 1.0
  %v103 = vmul.f32 %v102, %v97
  %v104 = vand.u32 2147483647, %v97
  %vm105 = vcmp.lt.f32.partialorder %v104, 0.0004427343
  %v106 = vsel %vm105, %v103, %v100
  %v107 = vadd.f32 %v93, %v106
  %v108 = vadd.f32 %v85, %v107
  %s109 = scalar_lea.vmem %s0, 32
  %v110 = vld [vmem:[%s109] sm:$0xff]
  %s111 = sadd.s32 %s17, 5
  %v112 = vstv %s111
  %vm113 = vcmp.eq.s32.totalorder %v16, %v112
  %v114 = vsub.f32 0.0, %v110
  %v115 = vsel %vm113, %v114, %v110
  %v116 = vmax.f32 %v115, 0.0
  %v117 = vand.u32 2147483647, %v110
  %v118 = vsub.f32 0.0, %v117
  %v119 = vmul.f32 %v118, 1.442695
  %v120 = vpow.pop %v119
  %v121 = vadd.f32 %v120, 1.0
  %v122 = vlog2.pop %v121
  %v123 = vmul.f32 %v122, 0.6931472
  %v124 = vmul.f32 -0.5, %v120
  %v125 = vadd.f32 %v124, 1.0
  %v126 = vmul.f32 %v125, %v120
  %v127 = vand.u32 2147483647, %v120
  %vm128 = vcmp.lt.f32.partialorder %v127, 0.0004427343
  %v129 = vsel %vm128, %v126, %v123
  %v130 = vadd.f32 %v116, %v129
  %v131 = vadd.f32 %v108, %v130
  %s132 = scalar_lea.vmem %s0, 40
  %v133 = vld [vmem:[%s132] sm:$0xff]
  %s134 = sadd.s32 %s17, 6
  %v135 = vstv %s134
  %vm136 = vcmp.eq.s32.totalorder %v16, %v135
  %v137 = vsub.f32 0.0, %v133
  %v138 = vsel %vm136, %v137, %v133
  %v139 = vmax.f32 %v138, 0.0
  %v140 = vand.u32 2147483647, %v133
  %v141 = vsub.f32 0.0, %v140
  %v142 = vmul.f32 %v141, 1.442695
  %v143 = vpow.pop %v142
  %v144 = vadd.f32 %v143, 1.0
  %v145 = vlog2.pop %v144
  %v146 = vmul.f32 %v145, 0.6931472
  %v147 = vmul.f32 -0.5, %v143
  %v148 = vadd.f32 %v147, 1.0
  %v149 = vmul.f32 %v148, %v143
  %v150 = vand.u32 2147483647, %v143
  %vm151 = vcmp.lt.f32.partialorder %v150, 0.0004427343
  %v152 = vsel %vm151, %v149, %v146
  %v153 = vadd.f32 %v139, %v152
  %v154 = vadd.f32 %v131, %v153
  %s155 = scalar_lea.vmem %s0, 48
  %v156 = vld [vmem:[%s155] sm:$0xff]
  %s157 = sadd.s32 %s17, 7
  %v158 = vstv %s157
  %vm159 = vcmp.eq.s32.totalorder %v16, %v158
  %v160 = vsub.f32 0.0, %v156
  %v161 = vsel %vm159, %v160, %v156
  %v162 = vmax.f32 %v161, 0.0
  %v163 = vand.u32 2147483647, %v156
  %v164 = vsub.f32 0.0, %v163
  %v165 = vmul.f32 %v164, 1.442695
  %v166 = vpow.pop %v165
  %v167 = vadd.f32 %v166, 1.0
  %v168 = vlog2.pop %v167
  %v169 = vmul.f32 %v168, 0.6931472
  %v170 = vmul.f32 -0.5, %v166
  %v171 = vadd.f32 %v170, 1.0
  %v172 = vmul.f32 %v171, %v166
  %v173 = vand.u32 2147483647, %v166
  %vm174 = vcmp.lt.f32.partialorder %v173, 0.0004427343
  %v175 = vsel %vm174, %v172, %v169
  %v176 = vadd.f32 %v162, %v175
  %v177 = vadd.f32 %v154, %v176
  %v178 = vld [vmem:[#allocation2] sm:$0xff]
  %v179 = vadd.f32 %v178, %v177
  %180 = vst [vmem:[#allocation2] sm:$0xff] %v179
  // Predicated region
  $region14: #{bce_loss.1} parent=0 // pred_check
    %p181 = pneg %p11
  $region15: #{bce_loss.1} parent=0 // pred_check_branch
    %183 = sbr.rel (%p181) target = $region17
  $region16: #{bce_loss.1} parent=0 // pred_region
    %v184 = vld [vmem:[#allocation2] sm:$0xff]
    %v185 = vlaneseq
    %v186 = vshrl.u32 %v185, 7
    %v187 = vlaneseq
    %v188 = vand.u32 %v187, 127
    %s189 = smul.u32 0, 1024
    %v190 = vmul.u32 %v186, 128
    %v191 = vstv %s189
    %v192 = vadd.s32 %v191, %v190
    %v193 = vadd.s32 %v192, %v188
    %vm194 = vcmp.lt.s32.totalorder %v193, 16
    %v195 = vsel %vm194, %v184, 0.0
    %v196 = vadd.f32 %v195, 0.0
    %197 = vst [vmem:[%s2] sm:$0xff] %v196
  $region17: #{bce_loss.1} parent=0 // pred_fallthru
    _
  // Predicated region
  $region18: #{bce_loss.1} parent=0 // pred_check
    _
  $region19: #{bce_loss.1} parent=0 // pred_check_branch
    %199 = sbr.rel (0) target = $region21
  $region20: #{bce_loss.1} parent=0 // pred_region
    _
  $region21: #{bce_loss.1} parent=0 // pred_fallthru
    _
  // Predicated region
  $region22: #{bce_loss.1} parent=0 // pred_check
    _
  $region23: #{bce_loss.1} parent=0 // pred_check_branch
    %201 = sbr.rel (0) target = $region25
  $region24: #{bce_loss.1} parent=0 // pred_region
    _
  $region25: #{bce_loss.1} parent=0 // pred_fallthru
    _

</llo_original>
